<compile_context>
chip_gen: v5e
topology: v5e:2x2
jax: 0.10.0
libtpu: 0.0.40
codegen_flags: <defaults>
</compile_context>

<pallas_src>
import functools

import jax
import jax.numpy as jnp
from jax import lax
from jax.experimental import pallas as pl
from jax.experimental.pallas import tpu as pltpu

VOCAB = 256      # synthetic vocab size
HIDDEN = 32      # output_units
MAX_POS = 8      # max_positions

LANE = 128
SUBLANE = 8
BATCH_TILE = 8                 # batches per grid step (sublane aligned)
MAX_RESIDENT_TABLE_BYTES = 8 << 20   # guard for the resident-table strategy


def _round_up(x, m):
    return (x + m - 1) // m * m


def encoder_kernel(tokens_ref,    # VMEM [row_tile, 1]     int32
                   lengths_ref,   # VMEM [TB, 1]           int32
                   table_ref,     # VMEM [V_pad, H_pad]    bf16   (resident: same block every step)
                   wordemb_ref,   # VMEM [row_tile, H_pad] bf16/f32 (out)
                   sentemb_ref,   # VMEM [TB, H_pad]       f32    (out)
                   mask_ref,      # VMEM [TB, M_lane]      f32    (out)
                   *, seq_len):
    row_tile = tokens_ref.shape[0]
    v_pad = table_ref.shape[0]
    tb, m_lane = mask_ref.shape
    s = seq_len

    # ---- embedding gather as a lane-dense one-hot MXU matmul (bf16, f32 acc) ----
    tokens = tokens_ref[...]                                          # [row_tile, 1]
    vocab_ids = lax.broadcasted_iota(jnp.int32, (row_tile, v_pad), 1)
    onehot = (vocab_ids == tokens).astype(jnp.bfloat16)               # exact 0/1
    contrib = jnp.dot(onehot, table_ref[...],
                      preferred_element_type=jnp.float32)             # [row_tile, H_pad] f32
    wordemb_ref[...] = contrib.astype(wordemb_ref.dtype)              # lossless: one bf16 row/token

    # ---- length mask over a full 128-lane slab (vector load of lengths) ----
    len_vec = lengths_ref[...]                                        # [TB, 1] int32
    pos = lax.broadcasted_iota(jnp.int32, (tb, m_lane), 1)
    mask_ref[...] = (pos < len_vec).astype(jnp.float32)

    # ---- mean pool fused on the MXU, computed once per tile ----
    # pool[b, r] = 1 iff row r belongs to batch b and its in-sequence position < len[b].
    r_ids = lax.broadcasted_iota(jnp.int32, (tb, row_tile), 1)
    b_ids = lax.broadcasted_iota(jnp.int32, (tb, row_tile), 0)
    s_off = r_ids - b_ids * s                                         # position within batch b (or OOR)
    lim = jnp.minimum(len_vec, s)
    pool = ((s_off >= 0) & (s_off < lim)).astype(jnp.float32)         # [TB, row_tile]
    pooled = jnp.dot(pool, contrib, preferred_element_type=jnp.float32)  # [TB, H_pad]

    denom = jnp.maximum(lim.astype(jnp.float32), 1.0)
    sentemb_ref[...] = pooled / denom                                 # exact mean (torch parity)


def encoder_forward(tokens, lengths, table, *, max_positions=MAX_POS):
    V, H = table.shape

    # check_lengths semantics: clamp lengths, truncate tokens to max_positions.
    lengths = jnp.minimum(lengths.astype(jnp.int32), max_positions)
    tokens = tokens[:, :max_positions]
    B, S = tokens.shape
    lengths = jnp.minimum(lengths, S)

    # Out-of-range token ids are clamped into the table (semantic choice: alias to last row).
    tokens = jnp.clip(tokens.astype(jnp.int32), 0, V - 1)

    # Lane/sublane-dense padded layout (padding stripped in the wrapper).
    H_pad = _round_up(H, LANE)
    V_pad = _round_up(V, LANE)
    M_lane = _round_up(S, LANE)
    TB = BATCH_TILE
    B_pad = _round_up(B, TB)
    row_tile = TB * S                 # flattened rows per grid step (always a multiple of 8)
    R_pad = B_pad * S

    # Resident-table strategy guard (see TODO at top for large vocabs).
    table_bytes = V_pad * H_pad * 2
    assert table_bytes <= MAX_RESIDENT_TABLE_BYTES, (
        "embedding table too large for the resident-in-VMEM gather strategy")

    # bf16 wordemb needs a 16-aligned sublane block; fall back to f32 otherwise.
    wordemb_dtype = jnp.bfloat16 if row_tile % 16 == 0 else jnp.float32
    wordemb_bytes = 2 if wordemb_dtype == jnp.bfloat16 else 4

    # Wrapper-side layout plumbing (free): pad + flatten.
    tokens_flat = jnp.zeros((R_pad, 1), jnp.int32).at[:B * S, 0].set(tokens.reshape(-1))
    lengths_col = jnp.zeros((B_pad, 1), jnp.int32).at[:B, 0].set(lengths)
    table_pad = jnp.zeros((V_pad, H_pad), jnp.bfloat16).at[:V, :H].set(
        table.astype(jnp.bfloat16))

    grid = (B_pad // TB,)

    # VMEM budget from actual block sizes: resident table + double-buffered
    # input blocks + double-buffered output blocks, with 4x headroom.
    est = (table_bytes
           + 2 * (row_tile * 4 + TB * 4)                          # tokens + lengths blocks
           + 2 * (row_tile * H_pad * wordemb_bytes                 # wordemb block
                  + TB * H_pad * 4 + TB * M_lane * 4))             # sentemb + mask blocks
    vmem_limit = min(32 << 20, max(4 << 20, 4 * est))

    kernel = functools.partial(encoder_kernel, seq_len=S)

    wordemb_flat, sentemb_pad, mask_pad = pl.pallas_call(
        kernel,
        out_shape=(
            jax.ShapeDtypeStruct((R_pad, H_pad), wordemb_dtype),
            jax.ShapeDtypeStruct((B_pad, H_pad), jnp.float32),
            jax.ShapeDtypeStruct((B_pad, M_lane), jnp.float32),
        ),
        grid=grid,
        in_specs=[
            pl.BlockSpec((row_tile, 1), lambda i: (i, 0)),
            pl.BlockSpec((TB, 1), lambda i: (i, 0)),
            pl.BlockSpec((V_pad, H_pad), lambda i: (0, 0)),   # whole table, resident across steps
        ],
        out_specs=(
            pl.BlockSpec((row_tile, H_pad), lambda i: (i, 0)),
            pl.BlockSpec((TB, H_pad), lambda i: (i, 0)),
            pl.BlockSpec((TB, M_lane), lambda i: (i, 0)),
        ),
        compiler_params=pltpu.CompilerParams(
            dimension_semantics=("parallel",),   # batch tiles shard across TCs on v7x
            vmem_limit_bytes=vmem_limit,
        ),
    )(tokens_flat, lengths_col, table_pad)

    # Strip padding in the wrapper.
    wordemb = wordemb_flat[:B * S, :H].astype(jnp.float32).reshape(B, S, H)
    sentemb = sentemb_pad[:B, :H]
    mask = mask_pad[:B, :S]

    return {
        "sentemb": sentemb,
        "wordemb": wordemb,
        "mask": mask,
        "all_layers": [wordemb],   # single-layer synthetic encoder
        "extra": None,
    }


if __name__ == "__main__":
    key = jax.random.PRNGKey(0)
    k_tok, k_len, k_tab = jax.random.split(key, 3)

    # Small shapes; batch chosen so the parallel grid axis has 2 tiles.
    B, S = 16, 8
    tokens = jax.random.randint(k_tok, (B, S), 0, VOCAB, dtype=jnp.int32)
    lengths = jax.random.randint(k_len, (B,), 1, S + 1, dtype=jnp.int32)
    table = 0.02 * jax.random.normal(k_tab, (VOCAB, HIDDEN), dtype=jnp.float32)

    out = encoder_forward(tokens, lengths, table)
    jax.block_until_ready(out)

    # Pure-JAX reference (f32 table; kernel gathers an exact bf16-rounded table,
    # tolerances cover bf16 rounding only — division in-kernel is exact).
    wordemb_ref = jnp.take(table, tokens, axis=0)                        # [B,S,H]
    mask_ref = (jnp.arange(S)[None, :] < lengths[:, None]).astype(jnp.float32)
    sent_ref = (wordemb_ref * mask_ref[:, :, None]).sum(axis=1) / \
        jnp.maximum(lengths[:, None].astype(jnp.float32), 1.0)

    assert out["wordemb"].shape == (B, S, HIDDEN)
    assert out["sentemb"].shape == (B, HIDDEN)
    assert out["mask"].shape == (B, S)
    assert jnp.allclose(out["mask"], mask_ref)
    assert jnp.allclose(out["wordemb"], wordemb_ref, atol=1e-3)
    assert jnp.allclose(out["sentemb"], sent_ref, atol=2e-3)

    print("KERNEL_OK")
</pallas_src>

<mosaic_0001>
module attributes {stable_mosaic.version = 11 : i64} {
  func.func @encoder_kernel(%arg0: i32, %arg1: memref<64x1xi32, #tpu.memory_space<vmem>>, %arg2: memref<8x1xi32, #tpu.memory_space<vmem>>, %arg3: memref<256x128xbf16, #tpu.memory_space<vmem>>, %arg4: memref<64x128xbf16, #tpu.memory_space<vmem>>, %arg5: memref<8x128xf32, #tpu.memory_space<vmem>>, %arg6: memref<8x128xf32, #tpu.memory_space<vmem>>) attributes {dimension_semantics = [#tpu.dimension_semantics<parallel>], iteration_bounds = array<i64: 2>, scalar_prefetch = 0 : i64, scratch_operands = 0 : i64, tpu.core_type = #tpu.core_type<tc>, window_params = [{transform_indices = @transform_0, window_bounds = array<i64: 64, 1>}, {transform_indices = @transform_1, window_bounds = array<i64: 8, 1>}, {pipeline_mode = #tpu.pipeline_mode<synchronous>, transform_indices = @transform_2, window_bounds = array<i64: 256, 128>}, {transform_indices = @transform_3, window_bounds = array<i64: 64, 128>}, {transform_indices = @transform_4, window_bounds = array<i64: 8, 128>}, {transform_indices = @transform_5, window_bounds = array<i64: 8, 128>}]} {
    %c0 = arith.constant 0 : index
    %c0_0 = arith.constant 0 : index
    %0 = vector.load %arg1[%c0, %c0_0] : memref<64x1xi32, #tpu.memory_space<vmem>>, vector<64x1xi32>
    %1 = tpu.iota {dimensions = array<i32: 1>} : vector<64x256xi32>
    %2 = vector.broadcast %0 : vector<64x1xi32> to vector<64x256xi32>
    %3 = arith.cmpi eq, %1, %2 : vector<64x256xi32>
    %4 = arith.extui %3 : vector<64x256xi1> to vector<64x256xi32>
    %5 = arith.sitofp %4 : vector<64x256xi32> to vector<64x256xf32>
    %6 = arith.truncf %5 : vector<64x256xf32> to vector<64x256xbf16>
    %c0_1 = arith.constant 0 : index
    %c0_2 = arith.constant 0 : index
    %7 = vector.load %arg3[%c0_1, %c0_2] : memref<256x128xbf16, #tpu.memory_space<vmem>>, vector<256x128xbf16>
    %cst = arith.constant dense<0.000000e+00> : vector<64x128xf32>
    %8 = tpu.matmul %6, %7, %cst {dimension_numbers = #tpu.dot_dimension_numbers<[1], [0], [0], [1], [0, 0, 1, 1], [], []>} : vector<64x256xbf16>, vector<256x128xbf16>, vector<64x128xf32> -> vector<64x128xf32>
    %9 = arith.truncf %8 : vector<64x128xf32> to vector<64x128xbf16>
    %c0_3 = arith.constant 0 : index
    %c0_4 = arith.constant 0 : index
    %10 = vector.load %arg4[%c0_3, %c0_4] : memref<64x128xbf16, #tpu.memory_space<vmem>>, vector<64x128xbf16>
    tpu.vector_store %arg4[%c0_3, %c0_4], %9 {strides = array<i32>} : memref<64x128xbf16, #tpu.memory_space<vmem>>, vector<64x128xbf16>,
    %c0_5 = arith.constant 0 : index
    %c0_6 = arith.constant 0 : index
    %11 = vector.load %arg2[%c0_5, %c0_6] : memref<8x1xi32, #tpu.memory_space<vmem>>, vector<8x1xi32>
    %12 = tpu.iota {dimensions = array<i32: 1>} : vector<8x128xi32>
    %13 = vector.broadcast %11 : vector<8x1xi32> to vector<8x128xi32>
    %14 = arith.cmpi slt, %12, %13 : vector<8x128xi32>
    %15 = arith.extui %14 : vector<8x128xi1> to vector<8x128xi32>
    %16 = arith.sitofp %15 : vector<8x128xi32> to vector<8x128xf32>
    %c0_7 = arith.constant 0 : index
    %c0_8 = arith.constant 0 : index
    %17 = vector.load %arg6[%c0_7, %c0_8] : memref<8x128xf32, #tpu.memory_space<vmem>>, vector<8x128xf32>
    tpu.vector_store %arg6[%c0_7, %c0_8], %16 {strides = array<i32>} : memref<8x128xf32, #tpu.memory_space<vmem>>, vector<8x128xf32>,
    %18 = tpu.iota {dimensions = array<i32: 1>} : vector<8x64xi32>
    %19 = tpu.iota {dimensions = array<i32: 0>} : vector<8x64xi32>
    %c8_i32 = arith.constant 8 : i32
    %20 = vector.broadcast %c8_i32 : i32 to vector<8x64xi32>
    %21 = arith.muli %19, %20 : vector<8x64xi32>
    %22 = arith.subi %18, %21 : vector<8x64xi32>
    %c8_i32_9 = arith.constant 8 : i32
    %23 = vector.broadcast %c8_i32_9 : i32 to vector<8x1xi32>
    %24 = arith.minsi %11, %23 : vector<8x1xi32>
    %c0_i32 = arith.constant 0 : i32
    %25 = vector.broadcast %c0_i32 : i32 to vector<8x64xi32>
    %26 = arith.cmpi sge, %22, %25 : vector<8x64xi32>
    %27 = vector.broadcast %24 : vector<8x1xi32> to vector<8x64xi32>
    %28 = arith.cmpi slt, %22, %27 : vector<8x64xi32>
    %29 = arith.andi %26, %28 : vector<8x64xi1>
    %30 = arith.extui %29 : vector<8x64xi1> to vector<8x64xi32>
    %31 = arith.sitofp %30 : vector<8x64xi32> to vector<8x64xf32>
    %cst_10 = arith.constant dense<0.000000e+00> : vector<8x128xf32>
    %32 = tpu.matmul %31, %8, %cst_10 {dimension_numbers = #tpu.dot_dimension_numbers<[1], [0], [0], [1], [0, 0, 1, 1], [], []>} : vector<8x64xf32>, vector<64x128xf32>, vector<8x128xf32> -> vector<8x128xf32>
    %33 = arith.sitofp %24 : vector<8x1xi32> to vector<8x1xf32>
    %cst_11 = arith.constant 1.000000e+00 : f32
    %34 = vector.broadcast %cst_11 : f32 to vector<8x1xf32>
    %35 = arith.maximumf %33, %34 : vector<8x1xf32>
    %36 = vector.broadcast %35 : vector<8x1xf32> to vector<8x128xf32>
    %37 = arith.divf %32, %36 : vector<8x128xf32>
    %c0_12 = arith.constant 0 : index
    %c0_13 = arith.constant 0 : index
    %38 = vector.load %arg5[%c0_12, %c0_13] : memref<8x128xf32, #tpu.memory_space<vmem>>, vector<8x128xf32>
    tpu.vector_store %arg5[%c0_12, %c0_13], %37 {strides = array<i32>} : memref<8x128xf32, #tpu.memory_space<vmem>>, vector<8x128xf32>,
    return
  }
  func.func @transform_0(%arg0: i32) -> (i32, i32) {
    %c0_i32 = arith.constant 0 : i32
    %c0_i32_0 = arith.constant 0 : i32
    return %arg0, %c0_i32 : i32, i32
  }
  func.func @transform_1(%arg0: i32) -> (i32, i32) {
    %c0_i32 = arith.constant 0 : i32
    %c0_i32_0 = arith.constant 0 : i32
    return %arg0, %c0_i32 : i32, i32
  }
  func.func @transform_2(%arg0: i32) -> (i32, i32) {
    %c0_i32 = arith.constant 0 : i32
    %c0_i32_0 = arith.constant 0 : i32
    %c0_i32_1 = arith.constant 0 : i32
    return %c0_i32, %c0_i32_0 : i32, i32
  }
  func.func @transform_3(%arg0: i32) -> (i32, i32) {
    %c0_i32 = arith.constant 0 : i32
    %c0_i32_0 = arith.constant 0 : i32
    return %arg0, %c0_i32 : i32, i32
  }
  func.func @transform_4(%arg0: i32) -> (i32, i32) {
    %c0_i32 = arith.constant 0 : i32
    %c0_i32_0 = arith.constant 0 : i32
    return %arg0, %c0_i32 : i32, i32
  }
  func.func @transform_5(%arg0: i32) -> (i32, i32) {
    %c0_i32 = arith.constant 0 : i32
    %c0_i32_0 = arith.constant 0 : i32
    return %arg0, %c0_i32 : i32, i32
  }
}

</mosaic_0001>

<llo_original>
// kernel: tpu_custom_call.1
$region0: #{tpu_custom_call.1}
  #allocation0 [shape = 'u32[]', space=smem, size = 0x4, offset = 0x4, fixed_abs, tag = 'smem constant byte address 0x4 - core index']
  #allocation1 [shape = 'u32[72,128]{1,0:T(1,128)}', space=vmem, size = 0x9000, scoped, tag = 'internal scratch']
  %s0 = inlined_call_operand.vmem [shape: s32[128,1], index: 0, kind: input, shape index: {}]
  %s1 = inlined_call_operand.vmem [shape: s32[16,1], index: 1, kind: input, shape index: {}]
  %s2 = inlined_call_operand.vmem [shape: bf16[256,128], index: 2, kind: input, shape index: {}]
  %s3 = inlined_call_operand.hbm [shape: bf16[128,128], index: 3, kind: output, shape index: {0}]
  %s4 = inlined_call_operand.hbm [shape: f32[16,128], index: 4, kind: output, shape index: {1}]
  %s5 = inlined_call_operand.hbm [shape: f32[16,128], index: 5, kind: output, shape index: {2}]
  %6 = xla_tuple %s3, %s4, %s5
  %s7 = sld [smem:[#allocation0]]
  $region61: #{tpu_custom_call.1} parent=0
    _
  %s9 = ssub.s32 1, %s7
  %s10 = scalar_select 0, %s9, %s7
  $region1: #{tpu_custom_call.1} parent=0
    #allocation2 [shape = 'u8[32768]{0}', space=vmem, size = 0x8000, scoped, tag = 'output window, operand 0']
    #allocation3 [shape = 's32[2]{0}', space=sflag, size = 0x8, scoped, tag = 'scoped memory for tpu_custom_call.1']
    #allocation4 [shape = 'u8[8192]{0}', space=vmem, size = 0x2000, scoped, tag = 'output window, operand 1']
    #allocation5 [shape = 's32[2]{0}', space=sflag, size = 0x8, scoped, tag = 'scoped memory for tpu_custom_call.1']
    #allocation6 [shape = 'u8[8192]{0}', space=vmem, size = 0x2000, scoped, tag = 'output window, operand 2']
    %11 = vsyncpa [#allocation3], 0
    %s12 = scalar_lea.sflag [#allocation3], 1
    %13 = vsyncpa %s12, 0
    %14 = vsyncpa [#allocation5], 0
    %s15 = scalar_lea.sflag [#allocation5], 1
    %16 = vsyncpa %s15, 0
    loop: start=0, step=1, limit=4
    $region2: #{tpu_custom_call.1} parent=1 // loop_pre_header
      _
    $region3: #{tpu_custom_call.1} parent=1 // loop_header
      %s18 = sphi 0, %s22
      %p19 = scmp.ge.s32.totalorder %s18, 4
      %s28 = sphi 0, %s30
      %s31 = sphi 0, %s28
      %s32 = sphi 0, %s31
      %s48 = sphi 0, %s32
      %s54 = sphi 0, %s56
      %s57 = sphi 0, %s54
      %s58 = sphi 0, %s57
      %s74 = sphi 0, %s58
      %s78 = sphi 0, %s78
      %s80 = sphi 0, %s78
      %s81 = sphi 0, %s80
      %s95 = sphi 0, %s81
      %s101 = sphi 0, %s103
      %s104 = sphi 0, %s101
      %s105 = sphi 0, %s104
      %s121 = sphi 0, %s105
      %s127 = sphi 0, %s129
      %s130 = sphi 0, %s127
      %s131 = sphi 0, %s130
      %s147 = sphi 0, %s131
      %s153 = sphi 0, %s155
      %s156 = sphi 0, %s153
      %s157 = sphi 0, %s156
      %s173 = sphi 0, %s157
    $region4: #{tpu_custom_call.1} parent=1 // loop_header_branch
      %21 = sbr.rel (%p19) target = $region8
    $region5: #{tpu_custom_call.1} parent=1 // loop_body
      %s23 = ssub.s32 %s18, 1
      %s24 = ssub.s32 %s18, 2
      %s25 = sadd.s32 %s18, 1
      %s26 = ssub.s32 %s18, %s25
      %p27 = scmp.eq.s32.totalorder %s26, 0
      %s29 = sadd.s32 %s28, 1
      %s30 = scalar_select %p27, %s28, %s29
      %p33 = pneg %p27
      %p34 = scmp.eq.s32.totalorder %s18, 1
      %p35 = por %p33, %p34
      %p36 = scmp.ne.s32.totalorder %s28, %s31
      %p37 = scmp.eq.s32.totalorder %s18, 0
      %p38 = por %p36, %p37
      %p39 = scmp.ne.s32.totalorder %s28, %s31
      %p40 = scmp.eq.s32.totalorder %s23, 1
      %p41 = por %p39, %p40
      %p42 = scmp.ne.s32.totalorder %s31, %s32
      %p43 = scmp.eq.s32.totalorder %s23, 0
      %p44 = por %p42, %p43
      %p45 = scmp.ne.s32.totalorder %s31, %s32
      %p46 = scmp.eq.s32.totalorder %s24, 1
      %p47 = por %p45, %p46
      %p49 = scmp.ne.s32.totalorder %s32, %s48
      %p50 = scmp.eq.s32.totalorder %s24, 0
      %p51 = por %p49, %p50
      %s52 = ssub.s32 %s18, %s25
      %p53 = scmp.eq.s32.totalorder %s52, 0
      %s55 = sadd.s32 %s54, 1
      %s56 = scalar_select %p53, %s54, %s55
      %p59 = pneg %p53
      %p60 = scmp.eq.s32.totalorder %s18, 1
      %p61 = por %p59, %p60
      %p62 = scmp.ne.s32.totalorder %s54, %s57
      %p63 = scmp.eq.s32.totalorder %s18, 0
      %p64 = por %p62, %p63
      %p65 = scmp.ne.s32.totalorder %s54, %s57
      %p66 = scmp.eq.s32.totalorder %s23, 1
      %p67 = por %p65, %p66
      %p68 = scmp.ne.s32.totalorder %s57, %s58
      %p69 = scmp.eq.s32.totalorder %s23, 0
      %p70 = por %p68, %p69
      %p71 = scmp.ne.s32.totalorder %s57, %s58
      %p72 = scmp.eq.s32.totalorder %s24, 1
      %p73 = por %p71, %p72
      %p75 = scmp.ne.s32.totalorder %s58, %s74
      %p76 = scmp.eq.s32.totalorder %s24, 0
      %p77 = por %p75, %p76
      %s79 = sadd.s32 %s78, 1
      %p82 = scmp.eq.s32.totalorder %s18, 1
      %p83 = scmp.ne.s32.totalorder %s78, %s80
      %p84 = scmp.eq.s32.totalorder %s18, 0
      %p85 = por %p83, %p84
      %p86 = scmp.ne.s32.totalorder %s78, %s80
      %p87 = scmp.eq.s32.totalorder %s23, 1
      %p88 = por %p86, %p87
      %p89 = scmp.ne.s32.totalorder %s80, %s81
      %p90 = scmp.eq.s32.totalorder %s23, 0
      %p91 = por %p89, %p90
      %p92 = scmp.ne.s32.totalorder %s80, %s81
      %p93 = scmp.eq.s32.totalorder %s24, 1
      %p94 = por %p92, %p93
      %p96 = scmp.ne.s32.totalorder %s81, %s95
      %p97 = scmp.eq.s32.totalorder %s24, 0
      %p98 = por %p96, %p97
      %s99 = ssub.s32 %s18, %s25
      %p100 = scmp.eq.s32.totalorder %s99, 0
      %s102 = sadd.s32 %s101, 1
      %s103 = scalar_select %p100, %s101, %s102
      %p106 = pneg %p100
      %p107 = scmp.eq.s32.totalorder %s18, 1
      %p108 = por %p106, %p107
      %p109 = scmp.ne.s32.totalorder %s101, %s104
      %p110 = scmp.eq.s32.totalorder %s18, 0
      %p111 = por %p109, %p110
      %p112 = scmp.ne.s32.totalorder %s101, %s104
      %p113 = scmp.eq.s32.totalorder %s23, 1
      %p114 = por %p112, %p113
      %p115 = scmp.ne.s32.totalorder %s104, %s105
      %p116 = scmp.eq.s32.totalorder %s23, 0
      %p117 = por %p115, %p116
      %p118 = scmp.ne.s32.totalorder %s104, %s105
      %p119 = scmp.eq.s32.totalorder %s24, 1
      %p120 = por %p118, %p119
      %p122 = scmp.ne.s32.totalorder %s105, %s121
      %p123 = scmp.eq.s32.totalorder %s24, 0
      %p124 = por %p122, %p123
      %s125 = ssub.s32 %s18, %s25
      %p126 = scmp.eq.s32.totalorder %s125, 0
      %s128 = sadd.s32 %s127, 1
      %s129 = scalar_select %p126, %s127, %s128
      %p132 = pneg %p126
      %p133 = scmp.eq.s32.totalorder %s18, 1
      %p134 = por %p132, %p133
      %p135 = scmp.ne.s32.totalorder %s127, %s130
      %p136 = scmp.eq.s32.totalorder %s18, 0
      %p137 = por %p135, %p136
      %p138 = scmp.ne.s32.totalorder %s127, %s130
      %p139 = scmp.eq.s32.totalorder %s23, 1
      %p140 = por %p138, %p139
      %p141 = scmp.ne.s32.totalorder %s130, %s131
      %p142 = scmp.eq.s32.totalorder %s23, 0
      %p143 = por %p141, %p142
      %p144 = scmp.ne.s32.totalorder %s130, %s131
      %p145 = scmp.eq.s32.totalorder %s24, 1
      %p146 = por %p144, %p145
      %p148 = scmp.ne.s32.totalorder %s131, %s147
      %p149 = scmp.eq.s32.totalorder %s24, 0
      %p150 = por %p148, %p149
      %s151 = ssub.s32 %s18, %s25
      %p152 = scmp.eq.s32.totalorder %s151, 0
      %s154 = sadd.s32 %s153, 1
      %s155 = scalar_select %p152, %s153, %s154
      %p158 = pneg %p152
      %p159 = scmp.eq.s32.totalorder %s18, 1
      %p160 = por %p158, %p159
      %p161 = scmp.ne.s32.totalorder %s153, %s156
      %p162 = scmp.eq.s32.totalorder %s18, 0
      %p163 = por %p161, %p162
      %p164 = scmp.ne.s32.totalorder %s153, %s156
      %p165 = scmp.eq.s32.totalorder %s23, 1
      %p166 = por %p164, %p165
      %p167 = scmp.ne.s32.totalorder %s156, %s157
      %p168 = scmp.eq.s32.totalorder %s23, 0
      %p169 = por %p167, %p168
      %p170 = scmp.ne.s32.totalorder %s156, %s157
      %p171 = scmp.eq.s32.totalorder %s24, 1
      %p172 = por %p170, %p171
      %p174 = scmp.ne.s32.totalorder %s157, %s173
      %p175 = scmp.eq.s32.totalorder %s24, 0
      %p176 = por %p174, %p175
      %p177 = scmp.le.s32.totalorder 1, %s18
      %p178 = scmp.lt.s32.totalorder %s18, 3
      %p179 = pnand %p177, %p178
      %p180 = pneg %p179
      // Predicated region
      $region9: #{tpu_custom_call.1} parent=5 // pred_check
        _
      $region10: #{tpu_custom_call.1} parent=5 // pred_check_branch
        %182 = sbr.rel (%p179) target = $region12
      $region11: #{tpu_custom_call.1} parent=5 // pred_region
        %s183 = ssub.s32 %s18, 1
        // Predicated region
        $region13: #{tpu_custom_call.1} parent=11 // pred_check
          %p184 = pneg %p91
        $region14: #{tpu_custom_call.1} parent=11 // pred_check_branch
          %186 = sbr.rel (%p184) target = $region16
        $region15: #{tpu_custom_call.1} parent=11 // pred_region
          _
        $region16: #{tpu_custom_call.1} parent=11 // pred_fallthru
          _
      $region12: #{tpu_custom_call.1} parent=5 // pred_fallthru
        _
      %p187 = scmp.lt.s32.totalorder %s18, 2
      // Predicated region
      $region17: #{tpu_custom_call.1} parent=5 // pred_check
        %p188 = pneg %p187
      $region18: #{tpu_custom_call.1} parent=5 // pred_check_branch
        %190 = sbr.rel (%p188) target = $region20
      $region19: #{tpu_custom_call.1} parent=5 // pred_region
        // Predicated region
        $region21: #{tpu_custom_call.1} parent=19 // pred_check
          %p191 = pneg %p38
        $region22: #{tpu_custom_call.1} parent=19 // pred_check_branch
          %193 = sbr.rel (%p191) target = $region24
        $region23: #{tpu_custom_call.1} parent=19 // pred_region
          %s194 = smul.u32 8, %s18
          %p195 = scmp.lt.s32.totalorder %s194, 15
          %s196 = scalar_select %p195, %s194, 15
          %s197 = smul.addr %s196, 8
          %s198 = scalar_lea.vmem %s0, %s197
          %s199 = smul.u32 8, %s18
        $region24: #{tpu_custom_call.1} parent=19 // pred_fallthru
          _
        // Predicated region
        $region25: #{tpu_custom_call.1} parent=19 // pred_check
          %p200 = pneg %p64
        $region26: #{tpu_custom_call.1} parent=19 // pred_check_branch
          %202 = sbr.rel (%p200) target = $region28
        $region27: #{tpu_custom_call.1} parent=19 // pred_region
          %p203 = scmp.lt.s32.totalorder %s18, 1
          %s204 = scalar_select %p203, %s18, 1
          %s205 = smul.addr %s204, 8
          %s206 = scalar_lea.vmem %s1, %s205
        $region28: #{tpu_custom_call.1} parent=19 // pred_fallthru
          _
      $region20: #{tpu_custom_call.1} parent=5 // pred_fallthru
        _
      %p207 = scmp.le.s32.totalorder 1, %s18
      %p208 = scmp.lt.s32.totalorder %s18, 3
      %p209 = pnand %p207, %p208
      %p210 = pneg %p209
      // Predicated region
      $region29: #{tpu_custom_call.1} parent=5 // pred_check
        _
      $region30: #{tpu_custom_call.1} parent=5 // pred_check_branch
        %212 = sbr.rel (%p209) target = $region32
      $region31: #{tpu_custom_call.1} parent=5 // pred_region
        %s213 = ssub.s32 %s18, 1
        %s214 = smul.u32 8, %s23
        %p215 = scmp.lt.s32.totalorder %s214, 15
        %s216 = scalar_select %p215, %s214, 15
        %s217 = smul.addr %s216, 8
        %s218 = scalar_lea.vmem %s0, %s217
        %p219 = pneg %p44
        %p220 = pneg %p41
        %p221 = scmp.lt.s32.totalorder %s23, 1
        %s222 = scalar_select %p221, %s23, 1
        %s223 = smul.addr %s222, 8
        %s224 = scalar_lea.vmem %s1, %s223
        %p225 = pneg %p70
        %p226 = pneg %p67
        %p227 = pneg %p91
        %p228 = pneg %p88
        %p229 = pneg %p117
        %p230 = pneg %p114
        %s231 = sand.u32 %s104, 1
        %s232 = scalar_lea.sflag [#allocation3], %s231
        %s233 = sand.u32 %s104, 1
        %s234 = smul.addr %s233, 32
        %s235 = scalar_lea.vmem [#allocation2], %s234
        %p236 = pneg %p143
        %p237 = pneg %p140
        %s238 = sand.u32 %s23, 1
        %s239 = scalar_lea.sflag [#allocation5], %s238
        %s240 = sand.u32 %s130, 1
        %s241 = smul.addr %s240, 8
        %s242 = scalar_lea.vmem [#allocation4], %s241
        %p243 = pneg %p169
        %p244 = pneg %p166
        %s245 = sand.u32 %s23, 1
        %s246 = scalar_lea.sflag [#allocation5], %s245
        %s247 = sand.u32 %s156, 1
        %s248 = smul.addr %s247, 8
        %s249 = scalar_lea.vmem [#allocation6], %s248
        %s250 = smul.u32 8, %s23
        %p251 = scmp.lt.s32.totalorder %s250, 15
        %s252 = scalar_select %p251, %s250, 15
        %s253 = smul.addr %s252, 8
        %s254 = scalar_lea.vmem %s0, %s253
        %s255 = smul.u32 8, %s23
        %p256 = scmp.lt.s32.totalorder %s23, 1
        %s257 = scalar_select %p256, %s23, 1
        %s258 = smul.addr %s257, 8
        %s259 = scalar_lea.vmem %s1, %s258
        %s260 = smul.u32 8, %s23
        %v261 = vld [vmem:[%s254] sm:$0xff]
        %v262 = vld [vmem:[%s254 + $0x8] sm:$0xff]
        %v263 = vld [vmem:[%s254 + $0x10] sm:$0xff]
        %v264 = vld [vmem:[%s254 + $0x18] sm:$0xff]
        %v265 = vld [vmem:[%s254 + $0x20] sm:$0xff]
        %v266 = vld [vmem:[%s254 + $0x28] sm:$0xff]
        %v267 = vld [vmem:[%s254 + $0x30] sm:$0xff]
        %v268 = vld [vmem:[%s254 + $0x38] sm:$0xff]
        %v269 = vlaneseq
        %v270 = vand.u32 %v269, 127
        %v271 = vadd.s32 %v270, 128
        %272 = vset.pattern.permute.xlu0 0
        %273 = vperm.xlu0 %272, %v261
        %v274 = vpop.permute.xlu0 %273
        %275 = vset.pattern.permute.xlu0 0
        %276 = vperm.xlu0 %275, %v262
        %v277 = vpop.permute.xlu0 %276
        %278 = vset.pattern.permute.xlu0 0
        %279 = vperm.xlu0 %278, %v263
        %v280 = vpop.permute.xlu0 %279
        %281 = vset.pattern.permute.xlu0 0
        %282 = vperm.xlu0 %281, %v264
        %v283 = vpop.permute.xlu0 %282
        %284 = vset.pattern.permute.xlu0 0
        %285 = vperm.xlu0 %284, %v265
        %v286 = vpop.permute.xlu0 %285
        %287 = vset.pattern.permute.xlu0 0
        %288 = vperm.xlu0 %287, %v266
        %v289 = vpop.permute.xlu0 %288
        %290 = vset.pattern.permute.xlu0 0
        %291 = vperm.xlu0 %290, %v267
        %v292 = vpop.permute.xlu0 %291
        %293 = vset.pattern.permute.xlu0 0
        %294 = vperm.xlu0 %293, %v268
        %v295 = vpop.permute.xlu0 %294
        %vm296 = vcmp.eq.s32.totalorder %v270, %v274
        %vm297 = vcmp.eq.s32.totalorder %v271, %v274
        %vm298 = vcmp.eq.s32.totalorder %v270, %v277
        %vm299 = vcmp.eq.s32.totalorder %v271, %v277
        %vm300 = vcmp.eq.s32.totalorder %v270, %v280
        %vm301 = vcmp.eq.s32.totalorder %v271, %v280
        %vm302 = vcmp.eq.s32.totalorder %v270, %v283
        %vm303 = vcmp.eq.s32.totalorder %v271, %v283
        %vm304 = vcmp.eq.s32.totalorder %v270, %v286
        %vm305 = vcmp.eq.s32.totalorder %v271, %v286
        %vm306 = vcmp.eq.s32.totalorder %v270, %v289
        %vm307 = vcmp.eq.s32.totalorder %v271, %v289
        %vm308 = vcmp.eq.s32.totalorder %v270, %v292
        %vm309 = vcmp.eq.s32.totalorder %v271, %v292
        %vm310 = vcmp.eq.s32.totalorder %v270, %v295
        %vm311 = vcmp.eq.s32.totalorder %v271, %v295
        %v312 = vsel %vm296, 1, 0
        %v313 = vsel %vm297, 1, 0
        %v314 = vsel %vm298, 1, 0
        %v315 = vsel %vm299, 1, 0
        %v316 = vsel %vm300, 1, 0
        %v317 = vsel %vm301, 1, 0
        %v318 = vsel %vm302, 1, 0
        %v319 = vsel %vm303, 1, 0
        %v320 = vsel %vm304, 1, 0
        %v321 = vsel %vm305, 1, 0
        %v322 = vsel %vm306, 1, 0
        %v323 = vsel %vm307, 1, 0
        %v324 = vsel %vm308, 1, 0
        %v325 = vsel %vm309, 1, 0
        %v326 = vsel %vm310, 1, 0
        %v327 = vsel %vm311, 1, 0
        %v328 = vcvt.s32.f32 %v312
        %v329 = vcvt.s32.f32 %v313
        %v330 = vcvt.s32.f32 %v314
        %v331 = vcvt.s32.f32 %v315
        %v332 = vcvt.s32.f32 %v316
        %v333 = vcvt.s32.f32 %v317
        %v334 = vcvt.s32.f32 %v318
        %v335 = vcvt.s32.f32 %v319
        %v336 = vcvt.s32.f32 %v320
        %v337 = vcvt.s32.f32 %v321
        %v338 = vcvt.s32.f32 %v322
        %v339 = vcvt.s32.f32 %v323
        %v340 = vcvt.s32.f32 %v324
        %v341 = vcvt.s32.f32 %v325
        %v342 = vcvt.s32.f32 %v326
        %v343 = vcvt.s32.f32 %v327
        %v344 = vpack.c.bf16 %v330, %v328
        %v345 = vpack.c.bf16 %v331, %v329
        %v346 = vpack.c.bf16 %v334, %v332
        %v347 = vpack.c.bf16 %v335, %v333
        %v348 = vpack.c.bf16 %v338, %v336
        %v349 = vpack.c.bf16 %v339, %v337
        %v350 = vpack.c.bf16 %v342, %v340
        %v351 = vpack.c.bf16 %v343, %v341
        %v352 = vld [vmem:[%s2] sm:$0xf]
        %v353 = vld [vmem:[%s2 + $0x4] sm:$0xf]
        %v354 = vld [vmem:[%s2 + $0x8] sm:$0xf]
        %v355 = vld [vmem:[%s2 + $0xc] sm:$0xf]
        %v356 = vld [vmem:[%s2 + $0x10] sm:$0xf]
        %v357 = vld [vmem:[%s2 + $0x14] sm:$0xf]
        %v358 = vld [vmem:[%s2 + $0x18] sm:$0xf]
        %v359 = vld [vmem:[%s2 + $0x1c] sm:$0xf]
        %v360 = vld [vmem:[%s2 + $0x20] sm:$0xf]
        %v361 = vld [vmem:[%s2 + $0x24] sm:$0xf]
        %v362 = vld [vmem:[%s2 + $0x28] sm:$0xf]
        %v363 = vld [vmem:[%s2 + $0x2c] sm:$0xf]
        %v364 = vld [vmem:[%s2 + $0x30] sm:$0xf]
        %v365 = vld [vmem:[%s2 + $0x34] sm:$0xf]
        %v366 = vld [vmem:[%s2 + $0x38] sm:$0xf]
        %v367 = vld [vmem:[%s2 + $0x3c] sm:$0xf]
        %v368 = vld [vmem:[%s2 + $0x40] sm:$0xf]
        %v369 = vld [vmem:[%s2 + $0x44] sm:$0xf]
        %v370 = vld [vmem:[%s2 + $0x48] sm:$0xf]
        %v371 = vld [vmem:[%s2 + $0x4c] sm:$0xf]
        %v372 = vld [vmem:[%s2 + $0x50] sm:$0xf]
        %v373 = vld [vmem:[%s2 + $0x54] sm:$0xf]
        %v374 = vld [vmem:[%s2 + $0x58] sm:$0xf]
        %v375 = vld [vmem:[%s2 + $0x5c] sm:$0xf]
        %v376 = vld [vmem:[%s2 + $0x60] sm:$0xf]
        %v377 = vld [vmem:[%s2 + $0x64] sm:$0xf]
        %v378 = vld [vmem:[%s2 + $0x68] sm:$0xf]
        %v379 = vld [vmem:[%s2 + $0x6c] sm:$0xf]
        %v380 = vld [vmem:[%s2 + $0x70] sm:$0xf]
        %v381 = vld [vmem:[%s2 + $0x74] sm:$0xf]
        %v382 = vld [vmem:[%s2 + $0x78] sm:$0xf]
        %v383 = vld [vmem:[%s2 + $0x7c] sm:$0xf]
        %v416 = vunpack.c.l.b16 %v352
        %v417 = vunpack.c.l.b16 %v353
        %v418 = vunpack.c.l.b16 %v354
        %v419 = vunpack.c.l.b16 %v355
        %v420 = vunpack.c.l.b16 %v356
        %v421 = vunpack.c.l.b16 %v357
        %v422 = vunpack.c.l.b16 %v358
        %v423 = vunpack.c.l.b16 %v359
        %v424 = vunpack.c.l.b16 %v360
        %v425 = vunpack.c.l.b16 %v361
        %v426 = vunpack.c.l.b16 %v362
        %v427 = vunpack.c.l.b16 %v363
        %v428 = vunpack.c.l.b16 %v364
        %v429 = vunpack.c.l.b16 %v365
        %v430 = vunpack.c.l.b16 %v366
        %v431 = vunpack.c.l.b16 %v367
        %v432 = vunpack.c.l.b16 %v368
        %v433 = vunpack.c.l.b16 %v369
        %v434 = vunpack.c.l.b16 %v370
        %v435 = vunpack.c.l.b16 %v371
        %v436 = vunpack.c.l.b16 %v372
        %v437 = vunpack.c.l.b16 %v373
        %v438 = vunpack.c.l.b16 %v374
        %v439 = vunpack.c.l.b16 %v375
        %v440 = vunpack.c.l.b16 %v376
        %v441 = vunpack.c.l.b16 %v377
        %v442 = vunpack.c.l.b16 %v378
        %v443 = vunpack.c.l.b16 %v379
        %v444 = vunpack.c.l.b16 %v380
        %v445 = vunpack.c.l.b16 %v381
        %v446 = vunpack.c.l.b16 %v382
        %v447 = vunpack.c.l.b16 %v383
        %v448 = vpack.c.b16 %v417, %v416
        %v449 = vpack.c.b16 %v419, %v418
        %v450 = vpack.c.b16 %v421, %v420
        %v451 = vpack.c.b16 %v423, %v422
        %v452 = vpack.c.b16 %v425, %v424
        %v453 = vpack.c.b16 %v427, %v426
        %v454 = vpack.c.b16 %v429, %v428
        %v455 = vpack.c.b16 %v431, %v430
        %v456 = vpack.c.b16 %v433, %v432
        %v457 = vpack.c.b16 %v435, %v434
        %v458 = vpack.c.b16 %v437, %v436
        %v459 = vpack.c.b16 %v439, %v438
        %v460 = vpack.c.b16 %v441, %v440
        %v461 = vpack.c.b16 %v443, %v442
        %v462 = vpack.c.b16 %v445, %v444
        %v463 = vpack.c.b16 %v447, %v446
        %480 = vmatpush.bf16.msra.mxu0 %v455
        %481 = vmatpush.bf16.msra.mxu0 %v454
        %482 = vmatpush.bf16.msra.mxu0 %v453
        %483 = vmatpush.bf16.msra.mxu0 %v452
        %484 = vmatpush.bf16.msra.mxu0 %v451
        %485 = vmatpush.bf16.msra.mxu0 %v450
        %486 = vmatpush.bf16.msra.mxu0 %v449
        %487 = vmatpush.bf16.msra.mxu0 %v448
        %488 = vmatmul.bf16.gmra.mxu0 %v344
        %v489 = vpop.f32.mrf.mxu0
        %v490 = vadd.f32 0.0, %v489
        %v491 = vpop.f32.mrf.mxu0
        %v492 = vadd.f32 0.0, %v491
        %493 = vmatmul.bf16.gmra.mxu0 %v346
        %v494 = vpop.f32.mrf.mxu0
        %v495 = vadd.f32 0.0, %v494
        %v496 = vpop.f32.mrf.mxu0
        %v497 = vadd.f32 0.0, %v496
        %498 = vmatmul.bf16.gmra.mxu0 %v348
        %v499 = vpop.f32.mrf.mxu0
        %v500 = vadd.f32 0.0, %v499
        %v501 = vpop.f32.mrf.mxu0
        %v502 = vadd.f32 0.0, %v501
        %503 = vmatmul.bf16.gmra.mxu0 %v350
        %v504 = vpop.f32.mrf.mxu0
        %v505 = vadd.f32 0.0, %v504
        %v506 = vpop.f32.mrf.mxu0
        %v507 = vadd.f32 0.0, %v506
        %508 = vdwg.mxu0
        %509 = vmatpush.bf16.msra.mxu0 %v463
        %510 = vmatpush.bf16.msra.mxu0 %v462
        %511 = vmatpush.bf16.msra.mxu0 %v461
        %512 = vmatpush.bf16.msra.mxu0 %v460
        %513 = vmatpush.bf16.msra.mxu0 %v459
        %514 = vmatpush.bf16.msra.mxu0 %v458
        %515 = vmatpush.bf16.msra.mxu0 %v457
        %516 = vmatpush.bf16.msra.mxu0 %v456
        %517 = vmatmul.bf16.gmra.mxu0 %v345
        %v518 = vpop.f32.mrf.mxu0
        %v519 = vadd.f32 %v490, %v518
        %v520 = vpop.f32.mrf.mxu0
        %v521 = vadd.f32 %v492, %v520
        %522 = vmatmul.bf16.gmra.mxu0 %v347
        %v523 = vpop.f32.mrf.mxu0
        %v524 = vadd.f32 %v495, %v523
        %v525 = vpop.f32.mrf.mxu0
        %v526 = vadd.f32 %v497, %v525
        %527 = vmatmul.bf16.gmra.mxu0 %v349
        %v528 = vpop.f32.mrf.mxu0
        %v529 = vadd.f32 %v500, %v528
        %v530 = vpop.f32.mrf.mxu0
        %v531 = vadd.f32 %v502, %v530
        %532 = vmatmul.bf16.gmra.mxu0 %v351
        %v533 = vpop.f32.mrf.mxu0
        %v534 = vadd.f32 %v505, %v533
        %v535 = vpop.f32.mrf.mxu0
        %v536 = vadd.f32 %v507, %v535
        %537 = vdwg.mxu0
        %v538 = vpack.c.bf16 %v519, %v519
        %v539 = vpack.c.bf16 %v521, %v521
        %v540 = vpack.c.bf16 %v524, %v524
        %v541 = vpack.c.bf16 %v526, %v526
        %v542 = vpack.c.bf16 %v529, %v529
        %v543 = vpack.c.bf16 %v531, %v531
        %v544 = vpack.c.bf16 %v534, %v534
        %v545 = vpack.c.bf16 %v536, %v536
        %546 = vst [vmem:[%s235] sm:$0xf] %v538
        %547 = vst [vmem:[%s235 + $0x4] sm:$0xf] %v539
        %548 = vst [vmem:[%s235 + $0x8] sm:$0xf] %v540
        %549 = vst [vmem:[%s235 + $0xc] sm:$0xf] %v541
        %550 = vst [vmem:[%s235 + $0x10] sm:$0xf] %v542
        %551 = vst [vmem:[%s235 + $0x14] sm:$0xf] %v543
        %552 = vst [vmem:[%s235 + $0x18] sm:$0xf] %v544
        %553 = vst [vmem:[%s235 + $0x1c] sm:$0xf] %v545
        %v554 = vld [vmem:[%s259] sm:$0xff]
        %555 = vset.pattern.permute.xlu0 0
        %556 = vperm.xlu0 %555, %v554
        %v557 = vpop.permute.xlu0 %556
        %vm558 = vcmp.lt.s32.totalorder %v270, %v557
        %v559 = vsel %vm558, 1, 0
        %v560 = vcvt.s32.f32 %v559
        %561 = vst [vmem:[%s249] sm:$0xff] %v560
        %v562 = vlaneseq
        %v563 = vshrl.u32 %v562, 7
        %v564 = vmul.u32 %v563, 8
        %v565 = vsub.s32 %v270, %v564
        %vm566 = vcmp.lt.s32.totalorder %v554, 8
        %v567 = vsel %vm566, %v554, 8
        %vm568 = vcmp.ge.s32.totalorder %v565, 0
        %569 = vset.pattern.permute.xlu0 0
        %570 = vperm.xlu0 %569, %v567
        %v571 = vpop.permute.xlu0 %570
        %vm572 = vcmp.lt.s32.totalorder %v565, %v571
        %vm573 = vmand %vm568, %vm572
        %v574 = vsel %vm573, 1, 0
        %v575 = vcvt.s32.f32 %v574
        %vm576 = vcmask 523264
        %v578 = vsel %vm576, %v575, 0
        %580 = vmatpush.msra.mxu0 0.0
        %581 = vmatpush.msra.mxu0 0.0
        %582 = vmatpush.msra.mxu0 0.0
        %583 = vmatpush.msra.mxu0 0.0
        %584 = vmatpush.msra.mxu0 0.0
        %585 = vmatpush.msra.mxu0 0.0
        %586 = vmatpush.msra.mxu0 0.0
        %587 = vmatpush.msra.mxu0 0.0
        %588 = vmatpush.msra.mxu0 %v536
        %589 = vmatpush.msra.mxu0 %v534
        %590 = vmatpush.msra.mxu0 %v531
        %591 = vmatpush.msra.mxu0 %v529
        %592 = vmatpush.msra.mxu0 %v526
        %593 = vmatpush.msra.mxu0 %v524
        %594 = vmatpush.msra.mxu0 %v521
        %595 = vmatpush.msra.mxu0 %v519
        %596 = vmatmul.f32.gmra.mxu0 %v578
        %v597 = vpop.f32.mrf.mxu0
        %v598 = vadd.f32 0.0, %v597
        %599 = vdwg.mxu0
        %v600 = vcvt.s32.f32 %v567
        %v601 = vmax.f32 %v600, 1.0
        %603 = vset.pattern.permute.xlu0 0
        %604 = vperm.xlu0 %603, %v601
        %v605 = vpop.permute.xlu0 %604
        %v607 = vrcp.pop %v605
        %v608 = vmul.f32 %v605, %v607
        %v609 = vsub.f32 1.0, %v608
        %v610 = vmul.f32 %v607, %v609
        %v611 = vadd.f32 %v607, %v610
        %vm612 = vweird.f32 %v605
        %vm613 = vweird.f32 %v607
        %vm614 = vmor %vm612, %vm613
        %v615 = vsel %vm614, %v607, %v611
        %v616 = vand.u32 2147483647, %v605
        %vm617 = vcmp.eq.f32.partialorder %v616, 8.507059e+37
        %v618 = vand.u32 %v605, 2147483648
        %v619 = vor.u32 1.1754944e-38, %v618
        %v620 = vsel %vm617, %v619, %v615
        %v621 = vmul.f32 %v598, %v620
        %622 = vst [vmem:[%s242] sm:$0xff] %v621
        %s623 = sand.u32 %s104, 1
        %s624 = scalar_lea.sflag [#allocation3], %s623
        %s625 = sand.u32 %s104, 1
        %s626 = smul.addr %s625, 32
        %s627 = scalar_lea.vmem [#allocation2], %s626
        %s628 = sand.u32 %s23, 1
        %s629 = scalar_lea.sflag [#allocation5], %s628
        %s630 = sand.u32 %s130, 1
        %s631 = smul.addr %s630, 8
        %s632 = scalar_lea.vmem [#allocation4], %s631
        %s633 = sand.u32 %s23, 1
        %s634 = scalar_lea.sflag [#allocation5], %s633
        %s635 = sand.u32 %s156, 1
        %s636 = smul.addr %s635, 8
        %s637 = scalar_lea.vmem [#allocation6], %s636
        // Predicated region
        $region33: #{tpu_custom_call.1} parent=31 // pred_check
          %p638 = pneg %p114
        $region34: #{tpu_custom_call.1} parent=31 // pred_check_branch
          %640 = sbr.rel (%p638) target = $region36
        $region35: #{tpu_custom_call.1} parent=31 // pred_region
          %s641 = smul.u32 8, %s23
          %643 = vsyncadd %s624, 0
          %s644 = smul.addr %s641, 4
          %s645 = scalar_lea.hbm %s3, %s644
          %s646 = sshll.u32 %s627, 4
          %s647 = int_to_ptr.vmem [resolvable:$true] %s646
          %s648 = sshll.u32 %s645, 4
          %s649 = int_to_ptr.hbm [resolvable:$true] %s648
          %654 = dma.vmem_to_hbm [thread:$0]  %s647, 512, %s649, %s624, 64, 64, 4
        $region36: #{tpu_custom_call.1} parent=31 // pred_fallthru
          _
        // Predicated region
        $region37: #{tpu_custom_call.1} parent=31 // pred_check
          %p655 = pneg %p140
        $region38: #{tpu_custom_call.1} parent=31 // pred_check_branch
          %657 = sbr.rel (%p655) target = $region40
        $region39: #{tpu_custom_call.1} parent=31 // pred_region
          %659 = vsyncadd %s629, 0
          %s660 = smul.addr %s23, 8
          %s661 = scalar_lea.hbm %s4, %s660
          %s663 = sshll.u32 %s632, 4
          %s664 = int_to_ptr.vmem [resolvable:$true] %s663
          %s665 = sshll.u32 %s661, 4
          %s666 = int_to_ptr.hbm [resolvable:$true] %s665
          %668 = dma.vmem_to_hbm [thread:$0]  %s664, 128, %s666, %s629
        $region40: #{tpu_custom_call.1} parent=31 // pred_fallthru
          _
        // Predicated region
        $region41: #{tpu_custom_call.1} parent=31 // pred_check
          %p669 = pneg %p166
        $region42: #{tpu_custom_call.1} parent=31 // pred_check_branch
          %671 = sbr.rel (%p669) target = $region44
        $region43: #{tpu_custom_call.1} parent=31 // pred_region
          %673 = vsyncadd %s634, 0
          %s674 = smul.addr %s23, 8
          %s675 = scalar_lea.hbm %s5, %s674
          %s677 = sshll.u32 %s637, 4
          %s678 = int_to_ptr.vmem [resolvable:$true] %s677
          %s679 = sshll.u32 %s675, 4
          %s680 = int_to_ptr.hbm [resolvable:$true] %s679
          %682 = dma.vmem_to_hbm [thread:$0]  %s678, 128, %s680, %s634
        $region44: #{tpu_custom_call.1} parent=31 // pred_fallthru
          _
      $region32: #{tpu_custom_call.1} parent=5 // pred_fallthru
        _
      %p683 = scmp.le.s32.totalorder 2, %s18
      // Predicated region
      $region45: #{tpu_custom_call.1} parent=5 // pred_check
        %p684 = pneg %p683
      $region46: #{tpu_custom_call.1} parent=5 // pred_check_branch
        %686 = sbr.rel (%p684) target = $region48
      $region47: #{tpu_custom_call.1} parent=5 // pred_region
        %s687 = ssub.s32 %s18, 2
        // Predicated region
        $region49: #{tpu_custom_call.1} parent=47 // pred_check
          %p688 = pneg %p120
        $region50: #{tpu_custom_call.1} parent=47 // pred_check_branch
          %690 = sbr.rel (%p688) target = $region52
        $region51: #{tpu_custom_call.1} parent=47 // pred_region
          %s691 = sand.u32 %s105, 1
          %s692 = scalar_lea.sflag [#allocation3], %s691
          %s693 = sand.u32 %s105, 1
          %s694 = smul.addr %s693, 32
          %s695 = scalar_lea.vmem [#allocation2], %s694
          %697 = dma.done %s692, 512
        $region52: #{tpu_custom_call.1} parent=47 // pred_fallthru
          _
        // Predicated region
        $region53: #{tpu_custom_call.1} parent=47 // pred_check
          %p698 = pneg %p146
        $region54: #{tpu_custom_call.1} parent=47 // pred_check_branch
          %700 = sbr.rel (%p698) target = $region56
        $region55: #{tpu_custom_call.1} parent=47 // pred_region
          %s701 = sand.u32 %s24, 1
          %s702 = scalar_lea.sflag [#allocation5], %s701
          %s703 = sand.u32 %s131, 1
          %s704 = smul.addr %s703, 8
          %s705 = scalar_lea.vmem [#allocation4], %s704
          %707 = dma.done %s702, 128
        $region56: #{tpu_custom_call.1} parent=47 // pred_fallthru
          _
        // Predicated region
        $region57: #{tpu_custom_call.1} parent=47 // pred_check
          %p708 = pneg %p172
        $region58: #{tpu_custom_call.1} parent=47 // pred_check_branch
          %710 = sbr.rel (%p708) target = $region60
        $region59: #{tpu_custom_call.1} parent=47 // pred_region
          %s711 = sand.u32 %s24, 1
          %s712 = scalar_lea.sflag [#allocation5], %s711
          %s713 = sand.u32 %s157, 1
          %s714 = smul.addr %s713, 8
          %s715 = scalar_lea.vmem [#allocation6], %s714
          %717 = dma.done %s712, 128
        $region60: #{tpu_custom_call.1} parent=47 // pred_fallthru
          _
      $region48: #{tpu_custom_call.1} parent=5 // pred_fallthru
        _
    $region6: #{tpu_custom_call.1} parent=1 // loop_footer
      %s22 = sadd.s32 1, %s18
    $region7: #{tpu_custom_call.1} parent=1 // loop_footer_branch
      %17 = sbr.rel target = $region3
    $region8: #{tpu_custom_call.1} parent=1 // loop_exit
      _
    %718 = vsyncpa [#allocation3], 1
    %s719 = scalar_lea.sflag [#allocation3], 1
    %720 = vsyncpa %s719, 1
    %721 = vsyncpa [#allocation5], 1
    %s722 = scalar_lea.sflag [#allocation5], 1
    %723 = vsyncpa %s722, 1

</llo_original>
